<compile_context>
chip_gen: v5e
topology: v5e:2x2
jax: 0.10.0
libtpu: 0.0.40
codegen_flags: <defaults>
</compile_context>

<pallas_src>
import functools

import jax
import jax.numpy as jnp
from jax.experimental import pallas as pl
from jax.experimental.pallas import tpu as pltpu

HIDDEN_SIZE = 64 * 3              # 192
HIDDEN2_SIZE = HIDDEN_SIZE // 2   # 96
OUTPUT_SIZE = 1
NUM_FEATURES = 7                  # len(features)

_DEFAULT_TB = 1024                # batch-tile (lanes); multiple of 128


def _round_up(x, m):
    return (x + m - 1) // m * m


def _mlp_kernel(x_ref, w1_ref, b1_ref, w2_ref, b2_ref, w3_ref, b3_ref, o_ref):
    # x: (7, TB)   w1: (192, 7)   w2: (96, 192)   w3: (1, 96)
    # biases: (out, 1), broadcast across the lane (batch) dimension.
    x = x_ref[...]
    h1 = jnp.dot(w1_ref[...], x, preferred_element_type=jnp.float32) + b1_ref[...]
    h1 = jnp.maximum(h1, 0.0)                                    # ReLU -> (192, TB)
    h2 = jnp.dot(w2_ref[...], h1, preferred_element_type=jnp.float32) + b2_ref[...]
    h2 = jnp.maximum(h2, 0.0)                                    # ReLU -> (96, TB)
    out = jnp.dot(w3_ref[...], h2, preferred_element_type=jnp.float32) + b3_ref[...]
    o_ref[...] = out.astype(o_ref.dtype)                         # (1, TB) lane-dense


@functools.partial(jax.jit, static_argnames=("tb",))
def nn_forward(x, params, *, tb=_DEFAULT_TB):
    """Forward pass of the NN module. x: (B, ...) flattened to (B, 7)."""
    w1, b1, w2, b2, w3, b3 = params
    B = x.shape[0]
    x2d = x.reshape(B, -1).astype(jnp.float32)      # nn.Flatten()
    assert x2d.shape[1] == NUM_FEATURES

    # Batch tile: multiple of 128 lanes, no bigger than needed.
    TB = min(tb, _round_up(B, 128))
    B_pad = _round_up(B, TB)
    grid = (B_pad // TB,)

    # Batch-on-lanes: (7, B_pad), zero-padded tail lanes (sliced off afterwards).
    x_t = jnp.zeros((NUM_FEATURES, B_pad), jnp.float32).at[:, :B].set(x2d.T)

    # Weights / biases: full untiled blocks, constant index_map -> VMEM-resident.
    def const_spec(a):
        return pl.BlockSpec(a.shape, lambda i: (0,) * a.ndim)

    weight_bytes = sum(int(p.size) * 4 for p in params)
    cost = pl.CostEstimate(
        flops=2 * B_pad * (NUM_FEATURES * HIDDEN_SIZE
                           + HIDDEN_SIZE * HIDDEN2_SIZE
                           + HIDDEN2_SIZE * OUTPUT_SIZE),
        transcendentals=0,
        bytes_accessed=B_pad * (NUM_FEATURES + OUTPUT_SIZE) * 4 + weight_bytes,
    )

    out_t = pl.pallas_call(
        _mlp_kernel,
        out_shape=jax.ShapeDtypeStruct((OUTPUT_SIZE, B_pad), jnp.float32),
        grid=grid,
        in_specs=[
            pl.BlockSpec((NUM_FEATURES, TB), lambda i: (0, i)),   # x tile
            const_spec(w1), const_spec(b1),
            const_spec(w2), const_spec(b2),
            const_spec(w3), const_spec(b3),
        ],
        out_specs=pl.BlockSpec((OUTPUT_SIZE, TB), lambda i: (0, i)),
        compiler_params=pltpu.CompilerParams(
            dimension_semantics=("parallel",),      # shards across TCs on v7x
            vmem_limit_bytes=64 << 20,
        ),
        cost_estimate=cost,
    )(x_t, w1, b1, w2, b2, w3, b3)

    # Back to the torch output layout (B, 1).
    return out_t[:, :B].T


def init_params(key):
    """Deterministic init matching torch.nn.Linear default
    (U[-1/sqrt(fan_in), 1/sqrt(fan_in)]).
    Weights stored torch-style (out_features, in_features); biases (out_features, 1)."""
    dims = [(NUM_FEATURES, HIDDEN_SIZE),
            (HIDDEN_SIZE, HIDDEN2_SIZE),
            (HIDDEN2_SIZE, OUTPUT_SIZE)]
    params = []
    for (fan_in, fan_out) in dims:
        key, kw, kb = jax.random.split(key, 3)
        bound = 1.0 / jnp.sqrt(jnp.float32(fan_in))
        w = jax.random.uniform(kw, (fan_out, fan_in), jnp.float32, -bound, bound)
        b = jax.random.uniform(kb, (fan_out, 1), jnp.float32, -bound, bound)
        params += [w, b]
    return tuple(params)


def reference_forward(x, params):
    """Plain-JAX reference for correctness checking."""
    w1, b1, w2, b2, w3, b3 = params
    x2d = x.reshape(x.shape[0], -1).astype(jnp.float32)
    h1 = jnp.maximum(x2d @ w1.T + b1.T, 0.0)
    h2 = jnp.maximum(h1 @ w2.T + b2.T, 0.0)
    return h2 @ w3.T + b3.T


if __name__ == "__main__":
    key = jax.random.PRNGKey(0)
    params = init_params(key)

    # Small case: (B, 7) input, as the model's feature vector implies.
    key, kx = jax.random.split(key)
    B = 8
    x = jax.random.normal(kx, (B, NUM_FEATURES), jnp.float32)
    out = jax.block_until_ready(nn_forward(x, params))
    ref = reference_forward(x, params)
    assert out.shape == (B, OUTPUT_SIZE)
    assert jnp.allclose(out, ref, atol=1e-5, rtol=1e-5), "mismatch vs reference (B=8)"

    # Non-multiple-of-128 batch with an extra dim to exercise Flatten + padding.
    key, kx2 = jax.random.split(key)
    B2 = 300
    x2 = jax.random.normal(kx2, (B2, 1, NUM_FEATURES), jnp.float32)
    out2 = jax.block_until_ready(nn_forward(x2, params))
    ref2 = reference_forward(x2, params)
    assert out2.shape == (B2, OUTPUT_SIZE)
    assert jnp.allclose(out2, ref2, atol=1e-5, rtol=1e-5), "mismatch vs reference (B=300)"

    print("KERNEL_OK")
</pallas_src>

<mosaic_0001>
module attributes {stable_mosaic.version = 11 : i64} {
  func.func @_mlp_kernel(%arg0: i32, %arg1: memref<7x128xf32, #tpu.memory_space<vmem>>, %arg2: memref<192x7xf32, #tpu.memory_space<vmem>>, %arg3: memref<192x1xf32, #tpu.memory_space<vmem>>, %arg4: memref<96x192xf32, #tpu.memory_space<vmem>>, %arg5: memref<96x1xf32, #tpu.memory_space<vmem>>, %arg6: memref<1x96xf32, #tpu.memory_space<vmem>>, %arg7: memref<1x1xf32, #tpu.memory_space<vmem>>, %arg8: memref<1x128xf32, #tpu.memory_space<vmem>>) attributes {dimension_semantics = [#tpu.dimension_semantics<parallel>], iteration_bounds = array<i64: 1>, scalar_prefetch = 0 : i64, scratch_operands = 0 : i64, tpu.core_type = #tpu.core_type<tc>, window_params = [{transform_indices = @transform_0, window_bounds = array<i64: 7, 128>}, {pipeline_mode = #tpu.pipeline_mode<synchronous>, transform_indices = @transform_1, window_bounds = array<i64: 192, 7>}, {pipeline_mode = #tpu.pipeline_mode<synchronous>, transform_indices = @transform_2, window_bounds = array<i64: 192, 1>}, {pipeline_mode = #tpu.pipeline_mode<synchronous>, transform_indices = @transform_3, window_bounds = array<i64: 96, 192>}, {pipeline_mode = #tpu.pipeline_mode<synchronous>, transform_indices = @transform_4, window_bounds = array<i64: 96, 1>}, {pipeline_mode = #tpu.pipeline_mode<synchronous>, transform_indices = @transform_5, window_bounds = array<i64: 1, 96>}, {pipeline_mode = #tpu.pipeline_mode<synchronous>, transform_indices = @transform_6, window_bounds = array<i64: 1, 1>}, {transform_indices = @transform_7, window_bounds = array<i64: 1, 128>}]} {
    %c0 = arith.constant 0 : index
    %c0_0 = arith.constant 0 : index
    %0 = vector.load %arg1[%c0, %c0_0] : memref<7x128xf32, #tpu.memory_space<vmem>>, vector<7x128xf32>
    %c0_1 = arith.constant 0 : index
    %c0_2 = arith.constant 0 : index
    %1 = vector.load %arg2[%c0_1, %c0_2] : memref<192x7xf32, #tpu.memory_space<vmem>>, vector<192x7xf32>
    %cst = arith.constant dense<0.000000e+00> : vector<192x128xf32>
    %2 = tpu.matmul %1, %0, %cst {dimension_numbers = #tpu.dot_dimension_numbers<[1], [0], [0], [1], [0, 0, 1, 1], [], []>} : vector<192x7xf32>, vector<7x128xf32>, vector<192x128xf32> -> vector<192x128xf32>
    %c0_3 = arith.constant 0 : index
    %c0_4 = arith.constant 0 : index
    %3 = vector.load %arg3[%c0_3, %c0_4] : memref<192x1xf32, #tpu.memory_space<vmem>>, vector<192x1xf32>
    %4 = vector.broadcast %3 : vector<192x1xf32> to vector<192x128xf32>
    %5 = arith.addf %2, %4 : vector<192x128xf32>
    %cst_5 = arith.constant 0.000000e+00 : f32
    %6 = vector.broadcast %cst_5 : f32 to vector<192x128xf32>
    %7 = arith.maximumf %5, %6 : vector<192x128xf32>
    %c0_6 = arith.constant 0 : index
    %c0_7 = arith.constant 0 : index
    %8 = vector.load %arg4[%c0_6, %c0_7] : memref<96x192xf32, #tpu.memory_space<vmem>>, vector<96x192xf32>
    %cst_8 = arith.constant dense<0.000000e+00> : vector<96x128xf32>
    %9 = tpu.matmul %8, %7, %cst_8 {dimension_numbers = #tpu.dot_dimension_numbers<[1], [0], [0], [1], [0, 0, 1, 1], [], []>} : vector<96x192xf32>, vector<192x128xf32>, vector<96x128xf32> -> vector<96x128xf32>
    %c0_9 = arith.constant 0 : index
    %c0_10 = arith.constant 0 : index
    %10 = vector.load %arg5[%c0_9, %c0_10] : memref<96x1xf32, #tpu.memory_space<vmem>>, vector<96x1xf32>
    %11 = vector.broadcast %10 : vector<96x1xf32> to vector<96x128xf32>
    %12 = arith.addf %9, %11 : vector<96x128xf32>
    %cst_11 = arith.constant 0.000000e+00 : f32
    %13 = vector.broadcast %cst_11 : f32 to vector<96x128xf32>
    %14 = arith.maximumf %12, %13 : vector<96x128xf32>
    %c0_12 = arith.constant 0 : index
    %c0_13 = arith.constant 0 : index
    %15 = vector.load %arg6[%c0_12, %c0_13] : memref<1x96xf32, #tpu.memory_space<vmem>>, vector<1x96xf32>
    %cst_14 = arith.constant dense<0.000000e+00> : vector<1x128xf32>
    %16 = tpu.matmul %15, %14, %cst_14 {dimension_numbers = #tpu.dot_dimension_numbers<[1], [0], [0], [1], [0, 0, 1, 1], [], []>} : vector<1x96xf32>, vector<96x128xf32>, vector<1x128xf32> -> vector<1x128xf32>
    %c0_15 = arith.constant 0 : index
    %c0_16 = arith.constant 0 : index
    %17 = vector.load %arg7[%c0_15, %c0_16] : memref<1x1xf32, #tpu.memory_space<vmem>>, vector<1x1xf32>
    %18 = vector.broadcast %17 : vector<1x1xf32> to vector<1x128xf32>
    %19 = arith.addf %16, %18 : vector<1x128xf32>
    %c0_17 = arith.constant 0 : index
    %c0_18 = arith.constant 0 : index
    %20 = vector.load %arg8[%c0_17, %c0_18] : memref<1x128xf32, #tpu.memory_space<vmem>>, vector<1x128xf32>
    tpu.vector_store %arg8[%c0_17, %c0_18], %19 {strides = array<i32>} : memref<1x128xf32, #tpu.memory_space<vmem>>, vector<1x128xf32>,
    return
  }
  func.func @transform_0(%arg0: i32) -> (i32, i32) {
    %c0_i32 = arith.constant 0 : i32
    %c0_i32_0 = arith.constant 0 : i32
    return %c0_i32, %arg0 : i32, i32
  }
  func.func @transform_1(%arg0: i32) -> (i32, i32) {
    %c0_i32 = arith.constant 0 : i32
    %c0_i32_0 = arith.constant 0 : i32
    %c0_i32_1 = arith.constant 0 : i32
    return %c0_i32, %c0_i32_0 : i32, i32
  }
  func.func @transform_2(%arg0: i32) -> (i32, i32) {
    %c0_i32 = arith.constant 0 : i32
    %c0_i32_0 = arith.constant 0 : i32
    %c0_i32_1 = arith.constant 0 : i32
    return %c0_i32, %c0_i32_0 : i32, i32
  }
  func.func @transform_3(%arg0: i32) -> (i32, i32) {
    %c0_i32 = arith.constant 0 : i32
    %c0_i32_0 = arith.constant 0 : i32
    %c0_i32_1 = arith.constant 0 : i32
    return %c0_i32, %c0_i32_0 : i32, i32
  }
  func.func @transform_4(%arg0: i32) -> (i32, i32) {
    %c0_i32 = arith.constant 0 : i32
    %c0_i32_0 = arith.constant 0 : i32
    %c0_i32_1 = arith.constant 0 : i32
    return %c0_i32, %c0_i32_0 : i32, i32
  }
  func.func @transform_5(%arg0: i32) -> (i32, i32) {
    %c0_i32 = arith.constant 0 : i32
    %c0_i32_0 = arith.constant 0 : i32
    %c0_i32_1 = arith.constant 0 : i32
    return %c0_i32, %c0_i32_0 : i32, i32
  }
  func.func @transform_6(%arg0: i32) -> (i32, i32) {
    %c0_i32 = arith.constant 0 : i32
    %c0_i32_0 = arith.constant 0 : i32
    %c0_i32_1 = arith.constant 0 : i32
    return %c0_i32, %c0_i32_0 : i32, i32
  }
  func.func @transform_7(%arg0: i32) -> (i32, i32) {
    %c0_i32 = arith.constant 0 : i32
    %c0_i32_0 = arith.constant 0 : i32
    return %c0_i32, %arg0 : i32, i32
  }
}

</mosaic_0001>

<llo_original>
// kernel: nn_forward.1
$region0: #{nn_forward.1}
  #allocation0 [shape = 'u32[]', space=smem, size = 0x4, offset = 0x4, fixed_abs, tag = 'smem constant byte address 0x4 - core index']
  #allocation1 [shape = 'u32[72,128]{1,0:T(1,128)}', space=vmem, size = 0x9000, scoped, tag = 'internal scratch']
  #allocation2 [shape = 'f32[1,1]{1,0:T(1,128)S(1)}', space=vmem, size = 0x200, scoped, tag = 'scoped memory for nn_forward.1']
  %s0 = inlined_call_operand.vmem [shape: f32[7,128], index: 0, kind: input, shape index: {}]
  %s1 = inlined_call_operand.vmem [shape: f32[192,7], index: 1, kind: input, shape index: {}]
  %s2 = inlined_call_operand.vmem [shape: f32[192,1], index: 2, kind: input, shape index: {}]
  %s3 = inlined_call_operand.vmem [shape: f32[96,192], index: 3, kind: input, shape index: {}]
  %s4 = inlined_call_operand.vmem [shape: f32[96,1], index: 4, kind: input, shape index: {}]
  %s5 = inlined_call_operand.vmem [shape: f32[1,96], index: 5, kind: input, shape index: {}]
  %s6 = inlined_call_operand.<no memory space> [shape: f32[1,1], index: 6, kind: input, shape index: {}]
  %s7 = inlined_call_operand.vmem [shape: f32[1,128], index: 7, kind: output, shape index: {}]
  %s8 = sld [smem:[#allocation0]]
  $region38: #{nn_forward.1} parent=0
    _
  %s10 = ssub.s32 1, %s8
  %s11 = scalar_select 0, %s10, %s8
  %v12 = vstv %s6
  %13 = vst [vmem:[#allocation2] sm:$0x1] %v12
  // Predicated region
  $region2: #{nn_forward.1} parent=0 // pred_check
    _
  $region3: #{nn_forward.1} parent=0 // pred_check_branch
    %15 = sbr.rel (0) target = $region5
  $region4: #{nn_forward.1} parent=0 // pred_region
    _
  $region5: #{nn_forward.1} parent=0 // pred_fallthru
    _
  // Predicated region
  $region6: #{nn_forward.1} parent=0 // pred_check
    _
  $region7: #{nn_forward.1} parent=0 // pred_check_branch
    %17 = sbr.rel (0) target = $region9
  $region8: #{nn_forward.1} parent=0 // pred_region
    _
  $region9: #{nn_forward.1} parent=0 // pred_fallthru
    _
  // Predicated region
  $region10: #{nn_forward.1} parent=0 // pred_check
    _
  $region11: #{nn_forward.1} parent=0 // pred_check_branch
    %19 = sbr.rel (0) target = $region13
  $region12: #{nn_forward.1} parent=0 // pred_region
    _
  $region13: #{nn_forward.1} parent=0 // pred_fallthru
    _
  // Predicated region
  $region14: #{nn_forward.1} parent=0 // pred_check
    _
  $region15: #{nn_forward.1} parent=0 // pred_check_branch
    %21 = sbr.rel (0) target = $region17
  $region16: #{nn_forward.1} parent=0 // pred_region
    _
  $region17: #{nn_forward.1} parent=0 // pred_fallthru
    _
  // Predicated region
  $region18: #{nn_forward.1} parent=0 // pred_check
    _
  $region19: #{nn_forward.1} parent=0 // pred_check_branch
    %23 = sbr.rel (0) target = $region21
  $region20: #{nn_forward.1} parent=0 // pred_region
    _
  $region21: #{nn_forward.1} parent=0 // pred_fallthru
    _
  // Predicated region
  $region22: #{nn_forward.1} parent=0 // pred_check
    _
  $region23: #{nn_forward.1} parent=0 // pred_check_branch
    %25 = sbr.rel (0) target = $region25
  $region24: #{nn_forward.1} parent=0 // pred_region
    _
  $region25: #{nn_forward.1} parent=0 // pred_fallthru
    _
  // Predicated region
  $region26: #{nn_forward.1} parent=0 // pred_check
    _
  $region27: #{nn_forward.1} parent=0 // pred_check_branch
    %27 = sbr.rel (0) target = $region29
  $region28: #{nn_forward.1} parent=0 // pred_region
    _
  $region29: #{nn_forward.1} parent=0 // pred_fallthru
    _
  %v28 = vld [vmem:[%s0] sm:$0x7f]
  %v29 = vld [vmem:[%s1] sm:$0xff]
  %v30 = vld [vmem:[%s1 + $0x8] sm:$0xff]
  %v31 = vld [vmem:[%s1 + $0x10] sm:$0xff]
  %v32 = vld [vmem:[%s1 + $0x18] sm:$0xff]
  %v33 = vld [vmem:[%s1 + $0x20] sm:$0xff]
  %v34 = vld [vmem:[%s1 + $0x28] sm:$0xff]
  %v35 = vld [vmem:[%s1 + $0x30] sm:$0xff]
  %v36 = vld [vmem:[%s1 + $0x38] sm:$0xff]
  %v37 = vld [vmem:[%s1 + $0x40] sm:$0xff]
  %v38 = vld [vmem:[%s1 + $0x48] sm:$0xff]
  %v39 = vld [vmem:[%s1 + $0x50] sm:$0xff]
  %v40 = vld [vmem:[%s1 + $0x58] sm:$0xff]
  %v41 = vld [vmem:[%s1 + $0x60] sm:$0xff]
  %v42 = vld [vmem:[%s1 + $0x68] sm:$0xff]
  %v43 = vld [vmem:[%s1 + $0x70] sm:$0xff]
  %v44 = vld [vmem:[%s1 + $0x78] sm:$0xff]
  %v45 = vld [vmem:[%s1 + $0x80] sm:$0xff]
  %v46 = vld [vmem:[%s1 + $0x88] sm:$0xff]
  %v47 = vld [vmem:[%s1 + $0x90] sm:$0xff]
  %v48 = vld [vmem:[%s1 + $0x98] sm:$0xff]
  %v49 = vld [vmem:[%s1 + $0xa0] sm:$0xff]
  %v50 = vld [vmem:[%s1 + $0xa8] sm:$0xff]
  %v51 = vld [vmem:[%s1 + $0xb0] sm:$0xff]
  %v52 = vld [vmem:[%s1 + $0xb8] sm:$0xff]
  %v53 = vld [vmem:[%s2] sm:$0xff]
  %v54 = vld [vmem:[%s2 + $0x8] sm:$0xff]
  %v55 = vld [vmem:[%s2 + $0x10] sm:$0xff]
  %v56 = vld [vmem:[%s2 + $0x18] sm:$0xff]
  %v57 = vld [vmem:[%s2 + $0x20] sm:$0xff]
  %v58 = vld [vmem:[%s2 + $0x28] sm:$0xff]
  %v59 = vld [vmem:[%s2 + $0x30] sm:$0xff]
  %v60 = vld [vmem:[%s2 + $0x38] sm:$0xff]
  %v61 = vld [vmem:[%s2 + $0x40] sm:$0xff]
  %v62 = vld [vmem:[%s2 + $0x48] sm:$0xff]
  %v63 = vld [vmem:[%s2 + $0x50] sm:$0xff]
  %v64 = vld [vmem:[%s2 + $0x58] sm:$0xff]
  %v65 = vld [vmem:[%s2 + $0x60] sm:$0xff]
  %v66 = vld [vmem:[%s2 + $0x68] sm:$0xff]
  %v67 = vld [vmem:[%s2 + $0x70] sm:$0xff]
  %v68 = vld [vmem:[%s2 + $0x78] sm:$0xff]
  %v69 = vld [vmem:[%s2 + $0x80] sm:$0xff]
  %v70 = vld [vmem:[%s2 + $0x88] sm:$0xff]
  %v71 = vld [vmem:[%s2 + $0x90] sm:$0xff]
  %v72 = vld [vmem:[%s2 + $0x98] sm:$0xff]
  %v73 = vld [vmem:[%s2 + $0xa0] sm:$0xff]
  %v74 = vld [vmem:[%s2 + $0xa8] sm:$0xff]
  %v75 = vld [vmem:[%s2 + $0xb0] sm:$0xff]
  %v76 = vld [vmem:[%s2 + $0xb8] sm:$0xff]
  %78 = vset.pattern.permute.xlu0 0
  %79 = vperm.xlu0 %78, %v53
  %v80 = vpop.permute.xlu0 %79
  %83 = vset.pattern.permute.xlu0 0
  %84 = vperm.xlu0 %83, %v54
  %v85 = vpop.permute.xlu0 %84
  %88 = vset.pattern.permute.xlu0 0
  %89 = vperm.xlu0 %88, %v55
  %v90 = vpop.permute.xlu0 %89
  %93 = vset.pattern.permute.xlu0 0
  %94 = vperm.xlu0 %93, %v56
  %v95 = vpop.permute.xlu0 %94
  %98 = vset.pattern.permute.xlu0 0
  %99 = vperm.xlu0 %98, %v57
  %v100 = vpop.permute.xlu0 %99
  %103 = vset.pattern.permute.xlu0 0
  %104 = vperm.xlu0 %103, %v58
  %v105 = vpop.permute.xlu0 %104
  %108 = vset.pattern.permute.xlu0 0
  %109 = vperm.xlu0 %108, %v59
  %v110 = vpop.permute.xlu0 %109
  %113 = vset.pattern.permute.xlu0 0
  %114 = vperm.xlu0 %113, %v60
  %v115 = vpop.permute.xlu0 %114
  %118 = vset.pattern.permute.xlu0 0
  %119 = vperm.xlu0 %118, %v61
  %v120 = vpop.permute.xlu0 %119
  %123 = vset.pattern.permute.xlu0 0
  %124 = vperm.xlu0 %123, %v62
  %v125 = vpop.permute.xlu0 %124
  %128 = vset.pattern.permute.xlu0 0
  %129 = vperm.xlu0 %128, %v63
  %v130 = vpop.permute.xlu0 %129
  %133 = vset.pattern.permute.xlu0 0
  %134 = vperm.xlu0 %133, %v64
  %v135 = vpop.permute.xlu0 %134
  %138 = vset.pattern.permute.xlu0 0
  %139 = vperm.xlu0 %138, %v65
  %v140 = vpop.permute.xlu0 %139
  %143 = vset.pattern.permute.xlu0 0
  %144 = vperm.xlu0 %143, %v66
  %v145 = vpop.permute.xlu0 %144
  %148 = vset.pattern.permute.xlu0 0
  %149 = vperm.xlu0 %148, %v67
  %v150 = vpop.permute.xlu0 %149
  %153 = vset.pattern.permute.xlu0 0
  %154 = vperm.xlu0 %153, %v68
  %v155 = vpop.permute.xlu0 %154
  %158 = vset.pattern.permute.xlu0 0
  %159 = vperm.xlu0 %158, %v69
  %v160 = vpop.permute.xlu0 %159
  %163 = vset.pattern.permute.xlu0 0
  %164 = vperm.xlu0 %163, %v70
  %v165 = vpop.permute.xlu0 %164
  %168 = vset.pattern.permute.xlu0 0
  %169 = vperm.xlu0 %168, %v71
  %v170 = vpop.permute.xlu0 %169
  %173 = vset.pattern.permute.xlu0 0
  %174 = vperm.xlu0 %173, %v72
  %v175 = vpop.permute.xlu0 %174
  %178 = vset.pattern.permute.xlu0 0
  %179 = vperm.xlu0 %178, %v73
  %v180 = vpop.permute.xlu0 %179
  %183 = vset.pattern.permute.xlu0 0
  %184 = vperm.xlu0 %183, %v74
  %v185 = vpop.permute.xlu0 %184
  %188 = vset.pattern.permute.xlu0 0
  %189 = vperm.xlu0 %188, %v75
  %v190 = vpop.permute.xlu0 %189
  %193 = vset.pattern.permute.xlu0 0
  %194 = vperm.xlu0 %193, %v76
  %v195 = vpop.permute.xlu0 %194
  %vm197 = vcmask 56320
  %v199 = vsel %vm197, %v29, 0
  %v202 = vsel %vm197, %v30, 0
  %v205 = vsel %vm197, %v31, 0
  %v208 = vsel %vm197, %v32, 0
  %v211 = vsel %vm197, %v33, 0
  %v214 = vsel %vm197, %v34, 0
  %v217 = vsel %vm197, %v35, 0
  %v220 = vsel %vm197, %v36, 0
  %v223 = vsel %vm197, %v37, 0
  %v226 = vsel %vm197, %v38, 0
  %v229 = vsel %vm197, %v39, 0
  %v232 = vsel %vm197, %v40, 0
  %v235 = vsel %vm197, %v41, 0
  %v238 = vsel %vm197, %v42, 0
  %v241 = vsel %vm197, %v43, 0
  %v244 = vsel %vm197, %v44, 0
  %v247 = vsel %vm197, %v45, 0
  %v250 = vsel %vm197, %v46, 0
  %v253 = vsel %vm197, %v47, 0
  %v256 = vsel %vm197, %v48, 0
  %v259 = vsel %vm197, %v49, 0
  %v262 = vsel %vm197, %v50, 0
  %v265 = vsel %vm197, %v51, 0
  %v268 = vsel %vm197, %v52, 0
  %vm270 = vcmask 1046528
  %v272 = vsel %vm270, %v28, 0
  %274 = vmatpush.msra.mxu0 0.0
  %275 = vmatpush.msra.mxu0 0.0
  %276 = vmatpush.msra.mxu0 0.0
  %277 = vmatpush.msra.mxu0 0.0
  %278 = vmatpush.msra.mxu0 0.0
  %279 = vmatpush.msra.mxu0 0.0
  %280 = vmatpush.msra.mxu0 0.0
  %281 = vmatpush.msra.mxu0 0.0
  %282 = vmatpush.msra.mxu0 0.0
  %283 = vmatpush.msra.mxu0 0.0
  %284 = vmatpush.msra.mxu0 0.0
  %285 = vmatpush.msra.mxu0 0.0
  %286 = vmatpush.msra.mxu0 0.0
  %287 = vmatpush.msra.mxu0 0.0
  %288 = vmatpush.msra.mxu0 0.0
  %289 = vmatpush.msra.mxu0 %v272
  %290 = vmatmul.f32.gmra.mxu0 %v199
  %v291 = vpop.f32.mrf.mxu0
  %v292 = vadd.f32 %v80, %v291
  %293 = vmatmul.f32.gmra.mxu0 %v202
  %v294 = vpop.f32.mrf.mxu0
  %v295 = vadd.f32 %v85, %v294
  %296 = vmatmul.f32.gmra.mxu0 %v205
  %v297 = vpop.f32.mrf.mxu0
  %v298 = vadd.f32 %v90, %v297
  %299 = vmatmul.f32.gmra.mxu0 %v208
  %v300 = vpop.f32.mrf.mxu0
  %v301 = vadd.f32 %v95, %v300
  %302 = vmatmul.f32.gmra.mxu0 %v211
  %v303 = vpop.f32.mrf.mxu0
  %v304 = vadd.f32 %v100, %v303
  %305 = vmatmul.f32.gmra.mxu0 %v214
  %v306 = vpop.f32.mrf.mxu0
  %v307 = vadd.f32 %v105, %v306
  %308 = vmatmul.f32.gmra.mxu0 %v217
  %v309 = vpop.f32.mrf.mxu0
  %v310 = vadd.f32 %v110, %v309
  %311 = vmatmul.f32.gmra.mxu0 %v220
  %v312 = vpop.f32.mrf.mxu0
  %v313 = vadd.f32 %v115, %v312
  %314 = vmatmul.f32.gmra.mxu0 %v223
  %v315 = vpop.f32.mrf.mxu0
  %v316 = vadd.f32 %v120, %v315
  %317 = vmatmul.f32.gmra.mxu0 %v226
  %v318 = vpop.f32.mrf.mxu0
  %v319 = vadd.f32 %v125, %v318
  %320 = vmatmul.f32.gmra.mxu0 %v229
  %v321 = vpop.f32.mrf.mxu0
  %v322 = vadd.f32 %v130, %v321
  %323 = vmatmul.f32.gmra.mxu0 %v232
  %v324 = vpop.f32.mrf.mxu0
  %v325 = vadd.f32 %v135, %v324
  %326 = vmatmul.f32.gmra.mxu0 %v235
  %v327 = vpop.f32.mrf.mxu0
  %v328 = vadd.f32 %v140, %v327
  %329 = vmatmul.f32.gmra.mxu0 %v238
  %v330 = vpop.f32.mrf.mxu0
  %v331 = vadd.f32 %v145, %v330
  %332 = vmatmul.f32.gmra.mxu0 %v241
  %v333 = vpop.f32.mrf.mxu0
  %v334 = vadd.f32 %v150, %v333
  %335 = vmatmul.f32.gmra.mxu0 %v244
  %v336 = vpop.f32.mrf.mxu0
  %v337 = vadd.f32 %v155, %v336
  %338 = vmatmul.f32.gmra.mxu0 %v247
  %v339 = vpop.f32.mrf.mxu0
  %v340 = vadd.f32 %v160, %v339
  %341 = vmatmul.f32.gmra.mxu0 %v250
  %v342 = vpop.f32.mrf.mxu0
  %v343 = vadd.f32 %v165, %v342
  %344 = vmatmul.f32.gmra.mxu0 %v253
  %v345 = vpop.f32.mrf.mxu0
  %v346 = vadd.f32 %v170, %v345
  %347 = vmatmul.f32.gmra.mxu0 %v256
  %v348 = vpop.f32.mrf.mxu0
  %v349 = vadd.f32 %v175, %v348
  %350 = vmatmul.f32.gmra.mxu0 %v259
  %v351 = vpop.f32.mrf.mxu0
  %v352 = vadd.f32 %v180, %v351
  %353 = vmatmul.f32.gmra.mxu0 %v262
  %v354 = vpop.f32.mrf.mxu0
  %v355 = vadd.f32 %v185, %v354
  %356 = vmatmul.f32.gmra.mxu0 %v265
  %v357 = vpop.f32.mrf.mxu0
  %v358 = vadd.f32 %v190, %v357
  %359 = vmatmul.f32.gmra.mxu0 %v268
  %v360 = vpop.f32.mrf.mxu0
  %v361 = vadd.f32 %v195, %v360
  %362 = vdwg.mxu0
  %v363 = vmax.f32 %v292, 0.0
  %v364 = vmax.f32 %v295, 0.0
  %v365 = vmax.f32 %v298, 0.0
  %v366 = vmax.f32 %v301, 0.0
  %v367 = vmax.f32 %v304, 0.0
  %v368 = vmax.f32 %v307, 0.0
  %v369 = vmax.f32 %v310, 0.0
  %v370 = vmax.f32 %v313, 0.0
  %v371 = vmax.f32 %v316, 0.0
  %v372 = vmax.f32 %v319, 0.0
  %v373 = vmax.f32 %v322, 0.0
  %v374 = vmax.f32 %v325, 0.0
  %v375 = vmax.f32 %v328, 0.0
  %v376 = vmax.f32 %v331, 0.0
  %v377 = vmax.f32 %v334, 0.0
  %v378 = vmax.f32 %v337, 0.0
  %v379 = vmax.f32 %v340, 0.0
  %v380 = vmax.f32 %v343, 0.0
  %v381 = vmax.f32 %v346, 0.0
  %v382 = vmax.f32 %v349, 0.0
  %v383 = vmax.f32 %v352, 0.0
  %v384 = vmax.f32 %v355, 0.0
  %v385 = vmax.f32 %v358, 0.0
  %v386 = vmax.f32 %v361, 0.0
  %v387 = vld [vmem:[%s3] sm:$0xff]
  %v388 = vld [vmem:[%s3 + $0x8] sm:$0xff]
  %v389 = vld [vmem:[%s3 + $0x10] sm:$0xff]
  %v390 = vld [vmem:[%s3 + $0x18] sm:$0xff]
  %v391 = vld [vmem:[%s3 + $0x20] sm:$0xff]
  %v392 = vld [vmem:[%s3 + $0x28] sm:$0xff]
  %v393 = vld [vmem:[%s3 + $0x30] sm:$0xff]
  %v394 = vld [vmem:[%s3 + $0x38] sm:$0xff]
  %v395 = vld [vmem:[%s3 + $0x40] sm:$0xff]
  %v396 = vld [vmem:[%s3 + $0x48] sm:$0xff]
  %v397 = vld [vmem:[%s3 + $0x50] sm:$0xff]
  %v398 = vld [vmem:[%s3 + $0x58] sm:$0xff]
  %v399 = vld [vmem:[%s3 + $0x60] sm:$0xff]
  %v400 = vld [vmem:[%s3 + $0x68] sm:$0xff]
  %v401 = vld [vmem:[%s3 + $0x70] sm:$0xff]
  %v402 = vld [vmem:[%s3 + $0x78] sm:$0xff]
  %v403 = vld [vmem:[%s3 + $0x80] sm:$0xff]
  %v404 = vld [vmem:[%s3 + $0x88] sm:$0xff]
  %v405 = vld [vmem:[%s3 + $0x90] sm:$0xff]
  %v406 = vld [vmem:[%s3 + $0x98] sm:$0xff]
  %v407 = vld [vmem:[%s3 + $0xa0] sm:$0xff]
  %v408 = vld [vmem:[%s3 + $0xa8] sm:$0xff]
  %v409 = vld [vmem:[%s3 + $0xb0] sm:$0xff]
  %v410 = vld [vmem:[%s3 + $0xb8] sm:$0xff]
  %v411 = vld [vmem:[%s4] sm:$0xff]
  %v412 = vld [vmem:[%s4 + $0x8] sm:$0xff]
  %v413 = vld [vmem:[%s4 + $0x10] sm:$0xff]
  %v414 = vld [vmem:[%s4 + $0x18] sm:$0xff]
  %v415 = vld [vmem:[%s4 + $0x20] sm:$0xff]
  %v416 = vld [vmem:[%s4 + $0x28] sm:$0xff]
  %v417 = vld [vmem:[%s4 + $0x30] sm:$0xff]
  %v418 = vld [vmem:[%s4 + $0x38] sm:$0xff]
  %v419 = vld [vmem:[%s4 + $0x40] sm:$0xff]
  %v420 = vld [vmem:[%s4 + $0x48] sm:$0xff]
  %v421 = vld [vmem:[%s4 + $0x50] sm:$0xff]
  %v422 = vld [vmem:[%s4 + $0x58] sm:$0xff]
  %424 = vset.pattern.permute.xlu0 0
  %425 = vperm.xlu0 %424, %v411
  %v426 = vpop.permute.xlu0 %425
  %429 = vset.pattern.permute.xlu0 0
  %430 = vperm.xlu0 %429, %v412
  %v431 = vpop.permute.xlu0 %430
  %434 = vset.pattern.permute.xlu0 0
  %435 = vperm.xlu0 %434, %v413
  %v436 = vpop.permute.xlu0 %435
  %439 = vset.pattern.permute.xlu0 0
  %440 = vperm.xlu0 %439, %v414
  %v441 = vpop.permute.xlu0 %440
  %444 = vset.pattern.permute.xlu0 0
  %445 = vperm.xlu0 %444, %v415
  %v446 = vpop.permute.xlu0 %445
  %449 = vset.pattern.permute.xlu0 0
  %450 = vperm.xlu0 %449, %v416
  %v451 = vpop.permute.xlu0 %450
  %454 = vset.pattern.permute.xlu0 0
  %455 = vperm.xlu0 %454, %v417
  %v456 = vpop.permute.xlu0 %455
  %459 = vset.pattern.permute.xlu0 0
  %460 = vperm.xlu0 %459, %v418
  %v461 = vpop.permute.xlu0 %460
  %464 = vset.pattern.permute.xlu0 0
  %465 = vperm.xlu0 %464, %v419
  %v466 = vpop.permute.xlu0 %465
  %469 = vset.pattern.permute.xlu0 0
  %470 = vperm.xlu0 %469, %v420
  %v471 = vpop.permute.xlu0 %470
  %474 = vset.pattern.permute.xlu0 0
  %475 = vperm.xlu0 %474, %v421
  %v476 = vpop.permute.xlu0 %475
  %479 = vset.pattern.permute.xlu0 0
  %480 = vperm.xlu0 %479, %v422
  %v481 = vpop.permute.xlu0 %480
  %vm483 = vcmask 523264
  %v485 = vsel %vm483, %v388, 0
  %v488 = vsel %vm483, %v390, 0
  %v491 = vsel %vm483, %v392, 0
  %v494 = vsel %vm483, %v394, 0
  %v497 = vsel %vm483, %v396, 0
  %v500 = vsel %vm483, %v398, 0
  %v503 = vsel %vm483, %v400, 0
  %v506 = vsel %vm483, %v402, 0
  %v509 = vsel %vm483, %v404, 0
  %v512 = vsel %vm483, %v406, 0
  %v515 = vsel %vm483, %v408, 0
  %v518 = vsel %vm483, %v410, 0
  %520 = vmatpush.msra.mxu0 %v378
  %521 = vmatpush.msra.mxu0 %v377
  %522 = vmatpush.msra.mxu0 %v376
  %523 = vmatpush.msra.mxu0 %v375
  %524 = vmatpush.msra.mxu0 %v374
  %525 = vmatpush.msra.mxu0 %v373
  %526 = vmatpush.msra.mxu0 %v372
  %527 = vmatpush.msra.mxu0 %v371
  %528 = vmatpush.msra.mxu0 %v370
  %529 = vmatpush.msra.mxu0 %v369
  %530 = vmatpush.msra.mxu0 %v368
  %531 = vmatpush.msra.mxu0 %v367
  %532 = vmatpush.msra.mxu0 %v366
  %533 = vmatpush.msra.mxu0 %v365
  %534 = vmatpush.msra.mxu0 %v364
  %535 = vmatpush.msra.mxu0 %v363
  %536 = vmatmul.f32.gmra.mxu0 %v387
  %v537 = vpop.f32.mrf.mxu0
  %v538 = vadd.f32 %v426, %v537
  %539 = vmatmul.f32.gmra.mxu0 %v389
  %v540 = vpop.f32.mrf.mxu0
  %v541 = vadd.f32 %v431, %v540
  %542 = vmatmul.f32.gmra.mxu0 %v391
  %v543 = vpop.f32.mrf.mxu0
  %v544 = vadd.f32 %v436, %v543
  %545 = vmatmul.f32.gmra.mxu0 %v393
  %v546 = vpop.f32.mrf.mxu0
  %v547 = vadd.f32 %v441, %v546
  %548 = vmatmul.f32.gmra.mxu0 %v395
  %v549 = vpop.f32.mrf.mxu0
  %v550 = vadd.f32 %v446, %v549
  %551 = vmatmul.f32.gmra.mxu0 %v397
  %v552 = vpop.f32.mrf.mxu0
  %v553 = vadd.f32 %v451, %v552
  %554 = vmatmul.f32.gmra.mxu0 %v399
  %v555 = vpop.f32.mrf.mxu0
  %v556 = vadd.f32 %v456, %v555
  %557 = vmatmul.f32.gmra.mxu0 %v401
  %v558 = vpop.f32.mrf.mxu0
  %v559 = vadd.f32 %v461, %v558
  %560 = vmatmul.f32.gmra.mxu0 %v403
  %v561 = vpop.f32.mrf.mxu0
  %v562 = vadd.f32 %v466, %v561
  %563 = vmatmul.f32.gmra.mxu0 %v405
  %v564 = vpop.f32.mrf.mxu0
  %v565 = vadd.f32 %v471, %v564
  %566 = vmatmul.f32.gmra.mxu0 %v407
  %v567 = vpop.f32.mrf.mxu0
  %v568 = vadd.f32 %v476, %v567
  %569 = vmatmul.f32.gmra.mxu0 %v409
  %v570 = vpop.f32.mrf.mxu0
  %v571 = vadd.f32 %v481, %v570
  %572 = vdwg.mxu0
  %573 = vmatpush.msra.mxu0 0.0
  %574 = vmatpush.msra.mxu0 0.0
  %575 = vmatpush.msra.mxu0 0.0
  %576 = vmatpush.msra.mxu0 0.0
  %577 = vmatpush.msra.mxu0 0.0
  %578 = vmatpush.msra.mxu0 0.0
  %579 = vmatpush.msra.mxu0 0.0
  %580 = vmatpush.msra.mxu0 0.0
  %581 = vmatpush.msra.mxu0 %v386
  %582 = vmatpush.msra.mxu0 %v385
  %583 = vmatpush.msra.mxu0 %v384
  %584 = vmatpush.msra.mxu0 %v383
  %585 = vmatpush.msra.mxu0 %v382
  %586 = vmatpush.msra.mxu0 %v381
  %587 = vmatpush.msra.mxu0 %v380
  %588 = vmatpush.msra.mxu0 %v379
  %589 = vmatmul.f32.gmra.mxu0 %v485
  %v590 = vpop.f32.mrf.mxu0
  %v591 = vadd.f32 %v538, %v590
  %592 = vmatmul.f32.gmra.mxu0 %v488
  %v593 = vpop.f32.mrf.mxu0
  %v594 = vadd.f32 %v541, %v593
  %595 = vmatmul.f32.gmra.mxu0 %v491
  %v596 = vpop.f32.mrf.mxu0
  %v597 = vadd.f32 %v544, %v596
  %598 = vmatmul.f32.gmra.mxu0 %v494
  %v599 = vpop.f32.mrf.mxu0
  %v600 = vadd.f32 %v547, %v599
  %601 = vmatmul.f32.gmra.mxu0 %v497
  %v602 = vpop.f32.mrf.mxu0
  %v603 = vadd.f32 %v550, %v602
  %604 = vmatmul.f32.gmra.mxu0 %v500
  %v605 = vpop.f32.mrf.mxu0
  %v606 = vadd.f32 %v553, %v605
  %607 = vmatmul.f32.gmra.mxu0 %v503
  %v608 = vpop.f32.mrf.mxu0
  %v609 = vadd.f32 %v556, %v608
  %610 = vmatmul.f32.gmra.mxu0 %v506
  %v611 = vpop.f32.mrf.mxu0
  %v612 = vadd.f32 %v559, %v611
  %613 = vmatmul.f32.gmra.mxu0 %v509
  %v614 = vpop.f32.mrf.mxu0
  %v615 = vadd.f32 %v562, %v614
  %616 = vmatmul.f32.gmra.mxu0 %v512
  %v617 = vpop.f32.mrf.mxu0
  %v618 = vadd.f32 %v565, %v617
  %619 = vmatmul.f32.gmra.mxu0 %v515
  %v620 = vpop.f32.mrf.mxu0
  %v621 = vadd.f32 %v568, %v620
  %622 = vmatmul.f32.gmra.mxu0 %v518
  %v623 = vpop.f32.mrf.mxu0
  %v624 = vadd.f32 %v571, %v623
  %625 = vdwg.mxu0
  %v626 = vmax.f32 %v591, 0.0
  %v627 = vmax.f32 %v594, 0.0
  %v628 = vmax.f32 %v597, 0.0
  %v629 = vmax.f32 %v600, 0.0
  %v630 = vmax.f32 %v603, 0.0
  %v631 = vmax.f32 %v606, 0.0
  %v632 = vmax.f32 %v609, 0.0
  %v633 = vmax.f32 %v612, 0.0
  %v634 = vmax.f32 %v615, 0.0
  %v635 = vmax.f32 %v618, 0.0
  %v636 = vmax.f32 %v621, 0.0
  %v637 = vmax.f32 %v624, 0.0
  %v638 = vld [vmem:[%s5] sm:$0x1]
  %v639 = vld [vmem:[#allocation2] sm:$0x1]
  %641 = vset.pattern.permute.xlu0 0
  %642 = vperm.xlu0 %641, %v639
  %v643 = vpop.permute.xlu0 %642
  %v645 = vperm.slane %v643, 0
  %vm646 = vcmask 785408
  %v648 = vsel %vm646, %v638, 0
  %650 = vmatpush.msra.mxu0 0.0
  %651 = vmatpush.msra.mxu0 0.0
  %652 = vmatpush.msra.mxu0 0.0
  %653 = vmatpush.msra.mxu0 0.0
  %654 = vmatpush.msra.mxu0 %v637
  %655 = vmatpush.msra.mxu0 %v636
  %656 = vmatpush.msra.mxu0 %v635
  %657 = vmatpush.msra.mxu0 %v634
  %658 = vmatpush.msra.mxu0 %v633
  %659 = vmatpush.msra.mxu0 %v632
  %660 = vmatpush.msra.mxu0 %v631
  %661 = vmatpush.msra.mxu0 %v630
  %662 = vmatpush.msra.mxu0 %v629
  %663 = vmatpush.msra.mxu0 %v628
  %664 = vmatpush.msra.mxu0 %v627
  %665 = vmatpush.msra.mxu0 %v626
  %666 = vmatmul.f32.gmra.mxu0 %v648
  %v667 = vpop.f32.mrf.mxu0
  %v668 = vadd.f32 %v645, %v667
  %669 = vdwg.mxu0
  %670 = vst [vmem:[%s7] sm:$0x1] %v668
  // Predicated region
  $region30: #{nn_forward.1} parent=0 // pred_check
    _
  $region31: #{nn_forward.1} parent=0 // pred_check_branch
    %672 = sbr.rel (0) target = $region33
  $region32: #{nn_forward.1} parent=0 // pred_region
    _
  $region33: #{nn_forward.1} parent=0 // pred_fallthru
    _
  // Predicated region
  $region34: #{nn_forward.1} parent=0 // pred_check
    _
  $region35: #{nn_forward.1} parent=0 // pred_check_branch
    %674 = sbr.rel (0) target = $region37
  $region36: #{nn_forward.1} parent=0 // pred_region
    _
  $region37: #{nn_forward.1} parent=0 // pred_fallthru
    _

</llo_original>
